<compile_context>
chip_gen: v7x
topology: tpu7x:2x2x1
jax: 0.10.0
libtpu: 0.0.40
codegen_flags: <defaults>
</compile_context>

<pallas_src>
import functools

import jax
import jax.numpy as jnp
from jax.experimental import pallas as pl
from jax.experimental.pallas import tpu as pltpu

EPS = 1e-6
LANES = 128
SUBLANES = 8
MAX_TILE_ROWS = 1024  # 1024x128 f32 block = 512 KiB; 2 inputs x 2 bufs = 2 MiB VMEM


def _cel_kernel(p_ref, t_ref, num_ref, den_ref, *, tile_rows, n_valid,
                needs_mask):
    """Elementwise work + (8,128) vector partial sums for one tile.

    num_elem = p + t - 2*p*t  (== (p - p*t) + (t - p*t)),  den_elem = p + t
    """
    p = jax.nn.sigmoid(p_ref[...].astype(jnp.float32))
    t = t_ref[...].astype(jnp.float32)

    if needs_mask:
        # Mask the ragged tail: rows past the array end (garbage in the padded
        # boundary block) and/or lane-pad zeros from the wrapper.
        i = pl.program_id(0)
        row = jax.lax.broadcasted_iota(jnp.int32, (tile_rows, LANES), 0)
        col = jax.lax.broadcasted_iota(jnp.int32, (tile_rows, LANES), 1)
        gidx = (i * tile_rows + row) * LANES + col
        valid = gidx < n_valid
        p = jnp.where(valid, p, 0.0)
        t = jnp.where(valid, t, 0.0)

    den_e = p + t
    num_e = den_e - 2.0 * (p * t)

    if tile_rows % SUBLANES == 0:
        # Pure-VPU partial reduction: fold sublane groups, keep an (8,128) vreg.
        num_part = num_e.reshape(tile_rows // SUBLANES, SUBLANES, LANES).sum(axis=0)
        den_part = den_e.reshape(tile_rows // SUBLANES, SUBLANES, LANES).sum(axis=0)
    else:
        # Small-input fallback (tile_rows == full row count < 8): one sublane
        # reduce, zero-pad to the (8,128) output block.
        zeros = jnp.zeros((SUBLANES - 1, LANES), jnp.float32)
        num_part = jnp.concatenate(
            [jnp.sum(num_e, axis=0, keepdims=True), zeros], axis=0)
        den_part = jnp.concatenate(
            [jnp.sum(den_e, axis=0, keepdims=True), zeros], axis=0)

    num_ref[...] = num_part
    den_ref[...] = den_part


@jax.jit
def cel_loss(pred, target):
    """CEL loss. pred/target: same shape (e.g. NCHW logits / binary mask)."""
    assert pred.shape == target.shape
    n = pred.size  # static under jit

    p_flat = pred.reshape(-1)
    t_flat = target.reshape(-1)

    rows = -(-n // LANES)
    padded = rows * LANES
    if padded != n:
        # Rare fallback (total size not a multiple of 128): tiny lane pad.
        # Pad values are masked out inside the kernel, so zeros are fine.
        p_flat = jnp.pad(p_flat, (0, padded - n))
        t_flat = jnp.pad(t_flat, (0, padded - n))

    p2d = p_flat.reshape(rows, LANES)
    t2d = t_flat.reshape(rows, LANES)

    tile_rows = min(MAX_TILE_ROWS, rows)
    grid = -(-rows // tile_rows)
    needs_mask = (padded != n) or (grid * tile_rows != rows)

    kernel = functools.partial(_cel_kernel, tile_rows=tile_rows, n_valid=n,
                               needs_mask=needs_mask)

    num_parts, den_parts = pl.pallas_call(
        kernel,
        out_shape=(
            jax.ShapeDtypeStruct((grid * SUBLANES, LANES), jnp.float32),
            jax.ShapeDtypeStruct((grid * SUBLANES, LANES), jnp.float32),
        ),
        grid_spec=pltpu.PrefetchScalarGridSpec(
            num_scalar_prefetch=0,
            grid=(grid,),
            in_specs=[
                pl.BlockSpec((tile_rows, LANES), lambda i: (i, 0)),
                pl.BlockSpec((tile_rows, LANES), lambda i: (i, 0)),
            ],
            out_specs=[
                pl.BlockSpec((SUBLANES, LANES), lambda i: (i, 0)),
                pl.BlockSpec((SUBLANES, LANES), lambda i: (i, 0)),
            ],
        ),
        compiler_params=pltpu.CompilerParams(
            dimension_semantics=("parallel",)),
    )(p2d, t2d)

    num = jnp.sum(num_parts)
    den = jnp.sum(den_parts)
    return num / (den + EPS)


def _cel_ref(pred, target):
    p = jax.nn.sigmoid(pred.astype(jnp.float32))
    t = target.astype(jnp.float32)
    inter = p * t
    num = jnp.sum(p - inter) + jnp.sum(t - inter)
    den = jnp.sum(p) + jnp.sum(t)
    return num / (den + EPS)


if __name__ == "__main__":
    key = jax.random.PRNGKey(0)
    k1, k2 = jax.random.split(key)
    # NCHW, as PyTorch would hand in: batch=2, channels=4, spatial=16x16
    pred = jax.random.normal(k1, (2, 4, 16, 16), dtype=jnp.float32)
    target = (jax.random.uniform(k2, (2, 4, 16, 16)) > 0.5).astype(jnp.float32)

    out = cel_loss(pred, target)
    jax.block_until_ready(out)

    ref = _cel_ref(pred, target)
    assert jnp.allclose(out, ref, atol=1e-5, rtol=1e-5), (out, ref)
    print("KERNEL_OK")
</pallas_src>

<mosaic_0001>
module attributes {stable_mosaic.version = 11 : i64} {
  func.func @_cel_kernel(%arg0: i32, %arg1: memref<16x128xf32, #tpu.memory_space<vmem>>, %arg2: memref<16x128xf32, #tpu.memory_space<vmem>>, %arg3: memref<8x128xf32, #tpu.memory_space<vmem>>, %arg4: memref<8x128xf32, #tpu.memory_space<vmem>>) attributes {dimension_semantics = [#tpu.dimension_semantics<parallel>], iteration_bounds = array<i64: 1>, scalar_prefetch = 0 : i64, scratch_operands = 0 : i64, tpu.core_type = #tpu.core_type<tc>, window_params = [{transform_indices = @transform_0, window_bounds = array<i64: 16, 128>}, {transform_indices = @transform_1, window_bounds = array<i64: 16, 128>}, {transform_indices = @transform_2, window_bounds = array<i64: 8, 128>}, {transform_indices = @transform_3, window_bounds = array<i64: 8, 128>}]} {
    %c0 = arith.constant 0 : index
    %c0_0 = arith.constant 0 : index
    %0 = vector.load %arg1[%c0, %c0_0] : memref<16x128xf32, #tpu.memory_space<vmem>>, vector<16x128xf32>
    %1 = arith.negf %0 : vector<16x128xf32>
    %2 = math.exp %1 : vector<16x128xf32>
    %cst = arith.constant 1.000000e+00 : f32
    %3 = vector.broadcast %cst : f32 to vector<16x128xf32>
    %4 = arith.addf %3, %2 : vector<16x128xf32>
    %5 = arith.divf %3, %4 : vector<16x128xf32>
    %c0_1 = arith.constant 0 : index
    %c0_2 = arith.constant 0 : index
    %6 = vector.load %arg2[%c0_1, %c0_2] : memref<16x128xf32, #tpu.memory_space<vmem>>, vector<16x128xf32>
    %7 = arith.addf %5, %6 : vector<16x128xf32>
    %8 = arith.mulf %5, %6 : vector<16x128xf32>
    %cst_3 = arith.constant 2.000000e+00 : f32
    %9 = vector.broadcast %cst_3 : f32 to vector<16x128xf32>
    %10 = arith.mulf %9, %8 : vector<16x128xf32>
    %11 = arith.subf %7, %10 : vector<16x128xf32>
    %12 = vector.shape_cast %11 : vector<16x128xf32> to vector<2x8x128xf32>
    %cst_4 = arith.constant dense<0.000000e+00> : vector<8x128xf32>
    %13 = vector.multi_reduction <add>, %12, %cst_4 [0] : vector<2x8x128xf32> to vector<8x128xf32>
    %14 = vector.shape_cast %7 : vector<16x128xf32> to vector<2x8x128xf32>
    %cst_5 = arith.constant dense<0.000000e+00> : vector<8x128xf32>
    %15 = vector.multi_reduction <add>, %14, %cst_5 [0] : vector<2x8x128xf32> to vector<8x128xf32>
    %c0_6 = arith.constant 0 : index
    %c0_7 = arith.constant 0 : index
    %16 = vector.load %arg3[%c0_6, %c0_7] : memref<8x128xf32, #tpu.memory_space<vmem>>, vector<8x128xf32>
    tpu.vector_store %arg3[%c0_6, %c0_7], %13 {strides = array<i32>} : memref<8x128xf32, #tpu.memory_space<vmem>>, vector<8x128xf32>,
    %c0_8 = arith.constant 0 : index
    %c0_9 = arith.constant 0 : index
    %17 = vector.load %arg4[%c0_8, %c0_9] : memref<8x128xf32, #tpu.memory_space<vmem>>, vector<8x128xf32>
    tpu.vector_store %arg4[%c0_8, %c0_9], %15 {strides = array<i32>} : memref<8x128xf32, #tpu.memory_space<vmem>>, vector<8x128xf32>,
    return
  }
  func.func @transform_0(%arg0: i32) -> (i32, i32) {
    %c0_i32 = arith.constant 0 : i32
    %c0_i32_0 = arith.constant 0 : i32
    return %arg0, %c0_i32 : i32, i32
  }
  func.func @transform_1(%arg0: i32) -> (i32, i32) {
    %c0_i32 = arith.constant 0 : i32
    %c0_i32_0 = arith.constant 0 : i32
    return %arg0, %c0_i32 : i32, i32
  }
  func.func @transform_2(%arg0: i32) -> (i32, i32) {
    %c0_i32 = arith.constant 0 : i32
    %c0_i32_0 = arith.constant 0 : i32
    return %arg0, %c0_i32 : i32, i32
  }
  func.func @transform_3(%arg0: i32) -> (i32, i32) {
    %c0_i32 = arith.constant 0 : i32
    %c0_i32_0 = arith.constant 0 : i32
    return %arg0, %c0_i32 : i32, i32
  }
}

</mosaic_0001>

<llo_original>
// kernel: cel_loss.1
$region0: #{cel_loss.1}
  #allocation0 [shape = 'u32[]', space=smem, size = 0x4, offset = 0x4, fixed_abs, tag = 'smem constant byte address 0x4 - core index']
  #allocation1 [shape = 'u32[144,128]{1,0:T(1,128)}', space=vmem, size = 0x12000, scoped, tag = 'internal scratch']
  %s0 = inlined_call_operand.vmem [shape: f32[16,128], index: 0, kind: input, shape index: {}]
  %s1 = inlined_call_operand.vmem [shape: f32[16,128], index: 1, kind: input, shape index: {}]
  %s2 = inlined_call_operand.vmem [shape: f32[8,128], index: 2, kind: output, shape index: {0}]
  %s3 = inlined_call_operand.vmem [shape: f32[8,128], index: 3, kind: output, shape index: {1}]
  %4 = xla_tuple %s2, %s3
  %s5 = sld [smem:[#allocation0]]
  $region26: #{cel_loss.1} parent=0
    _
  %s7 = ssub.s32 1, %s5
  %s8 = scalar_select 0, %s7, %s5
  // Predicated region
  $region2: #{cel_loss.1} parent=0 // pred_check
    _
  $region3: #{cel_loss.1} parent=0 // pred_check_branch
    %10 = sbr.rel (0) target = $region5
  $region4: #{cel_loss.1} parent=0 // pred_region
    _
  $region5: #{cel_loss.1} parent=0 // pred_fallthru
    _
  // Predicated region
  $region6: #{cel_loss.1} parent=0 // pred_check
    _
  $region7: #{cel_loss.1} parent=0 // pred_check_branch
    %12 = sbr.rel (0) target = $region9
  $region8: #{cel_loss.1} parent=0 // pred_region
    _
  $region9: #{cel_loss.1} parent=0 // pred_fallthru
    _
  %v13 = vld [vmem:[%s0] sm:$0xff]
  %v14 = vld [vmem:[%s0 + $0x8] sm:$0xff]
  %v15 = vxor.u32 %v13, 2147483648
  %v16 = vxor.u32 %v14, 2147483648
  %v17 = vmul.f32 %v15, 1.442695
  %v18 = vpow.pop %v17
  %v19 = vmul.f32 %v16, 1.442695
  %v20 = vpow.pop %v19
  %v21 = vadd.f32 %v18, 1.0
  %v22 = vadd.f32 %v20, 1.0
  %v23 = vrcp.pop %v21
  %v24 = vmul.f32 1.0, %v23
  %v25 = vrcp.pop %v22
  %v26 = vmul.f32 1.0, %v25
  %v27 = vld [vmem:[%s1] sm:$0xff]
  %v28 = vld [vmem:[%s1 + $0x8] sm:$0xff]
  %v29 = vadd.f32 %v24, %v27
  %v30 = vadd.f32 %v26, %v28
  %v31 = vmul.f32 %v24, %v27
  %v32 = vmul.f32 %v26, %v28
  %v33 = vmul.f32 %v31, 2.0
  %v34 = vmul.f32 %v32, 2.0
  %v35 = vsub.f32 %v29, %v33
  %v36 = vsub.f32 %v30, %v34
  %v37 = vadd.f32 %v35, %v36
  %v38 = vadd.f32 %v29, %v30
  %39 = vst [vmem:[%s2] sm:$0xff] %v37
  %40 = vst [vmem:[%s3] sm:$0xff] %v38
  // Predicated region
  $region10: #{cel_loss.1} parent=0 // pred_check
    _
  $region11: #{cel_loss.1} parent=0 // pred_check_branch
    %42 = sbr.rel (0) target = $region13
  $region12: #{cel_loss.1} parent=0 // pred_region
    _
  $region13: #{cel_loss.1} parent=0 // pred_fallthru
    _
  // Predicated region
  $region14: #{cel_loss.1} parent=0 // pred_check
    _
  $region15: #{cel_loss.1} parent=0 // pred_check_branch
    %44 = sbr.rel (0) target = $region17
  $region16: #{cel_loss.1} parent=0 // pred_region
    _
  $region17: #{cel_loss.1} parent=0 // pred_fallthru
    _
  // Predicated region
  $region18: #{cel_loss.1} parent=0 // pred_check
    _
  $region19: #{cel_loss.1} parent=0 // pred_check_branch
    %46 = sbr.rel (0) target = $region21
  $region20: #{cel_loss.1} parent=0 // pred_region
    _
  $region21: #{cel_loss.1} parent=0 // pred_fallthru
    _
  // Predicated region
  $region22: #{cel_loss.1} parent=0 // pred_check
    _
  $region23: #{cel_loss.1} parent=0 // pred_check_branch
    %48 = sbr.rel (0) target = $region25
  $region24: #{cel_loss.1} parent=0 // pred_region
    _
  $region25: #{cel_loss.1} parent=0 // pred_fallthru
    _

</llo_original>
